<compile_context>
chip_gen: v7x
topology: tpu7x:2x2x1
jax: 0.10.0
libtpu: 0.0.40
codegen_flags: <defaults>
</compile_context>

<pallas_src>
import functools
import numpy as np

import jax
import jax.numpy as jnp
from jax import lax
from jax.experimental import pallas as pl
from jax.experimental.pallas import tpu as pltpu


# ---------------------------------------------------------------------------
# padding helper (mirrors the PyTorch module's getpadding)
# ---------------------------------------------------------------------------
def getpadding(k, s, p, d):
    if isinstance(p, int):
        return p
    if p == "same":
        if s == 1:
            p = (k - 1) // 2
        if s > 1:
            p = int(np.ceil((k - s) / 2))
    if p == "valid":
        p = 0
    if d != 1:
        p = d * (k // 2)
    return p


# ---------------------------------------------------------------------------
# Pallas kernel: fused depthwise conv (k x k, groups=Cin) + pointwise 1x1 conv.
# One grid step = (one batch element, one tile of TH output rows).
# ---------------------------------------------------------------------------
def _sepconv_kernel(x_ref, wdw_ref, wpw_ref, o_ref, *, cin, cout, k, s, d, th, w_out):
    # x_ref  : (1, Cin, Hp, Wp)   padded NCHW input for this batch element (VMEM resident)
    # wdw_ref: (Cin*k*k,)         depthwise weights in SMEM, index (c*k + kh)*k + kw
    # wpw_ref: (Cout*Cin,)        pointwise weights in SMEM, index co*Cin + c
    # o_ref  : (1, th, Cout*W_out) lane-dense output row tile
    t = pl.program_id(1)
    row_base = pl.multiple_of(t * (th * s), th * s)   # first input row of this tile
    h_span = (th - 1) * s + 1
    w_span = (w_out - 1) * s + 1

    # --- depthwise conv: per-channel k*k tap MAC on small (row-band, W) planes (VPU) ---
    dw = []
    for c in range(cin):
        acc = None
        for kh in range(k):
            for kw in range(k):
                patch = x_ref[0, c,
                              pl.ds(row_base + kh * d, h_span),
                              kw * d: kw * d + w_span]
                if s > 1:
                    # stride handled on the loaded value; s == 1 in the test config
                    patch = patch[::s, ::s]
                term = patch.astype(jnp.float32) * wdw_ref[(c * k + kh) * k + kw]
                acc = term if acc is None else acc + term
        dw.append(acc)

    # --- pointwise 1x1 conv: scalar-broadcast MAC over Cin (tiny channels -> skip MXU) ---
    for co in range(cout):
        po = dw[0] * wpw_ref[co * cin + 0]
        for c in range(1, cin):
            po = po + dw[c] * wpw_ref[co * cin + c]
        # pack channel co into its lane sub-range of the lane-dense output slab
        o_ref[0, :, co * w_out:(co + 1) * w_out] = po.astype(o_ref.dtype)


# ---------------------------------------------------------------------------
# Wrapper: NCHW in / NCHW out (PyTorch convention), parameters in PyTorch shapes
# ---------------------------------------------------------------------------
def seperable_conv2d(x_nchw, w_depthwise, w_pointwise, *, k, s=1, p="same", d=1):
    """
    x_nchw     : (N, Cin, H, W)
    w_depthwise: (Cin, 1, k, k)     -- PyTorch depthwise conv weight (groups=Cin)
    w_pointwise: (Cout, Cin, 1, 1)  -- PyTorch 1x1 conv weight
    """
    n, cin, h, w = x_nchw.shape
    cout = w_pointwise.shape[0]
    pad = getpadding(k, s, p, d)

    h_out = (h + 2 * pad - d * (k - 1) - 1) // s + 1
    w_out = (w + 2 * pad - d * (k - 1) - 1) // s + 1

    th = 8                              # output-row tile height (sublane aligned)
    n_t = int(pl.cdiv(h_out, th))
    h_out_pad = n_t * th

    # rows the kernel may touch (last row tile can overrun into extra zero padding)
    hp_need = (h_out_pad - 1) * s + (k - 1) * d + 1
    extra_bottom = max(0, hp_need - (h + 2 * pad))

    # glue: zero padding in plain JAX (no layout transposes needed -- NCHW native)
    x_pad = jnp.pad(x_nchw, ((0, 0), (0, 0), (pad, pad + extra_bottom), (pad, pad)))
    hp, wp = x_pad.shape[2], x_pad.shape[3]

    # weights flattened to 1-D f32 so they live in SMEM and are read as scalars
    wdw_flat = w_depthwise.reshape(cin, k, k).reshape(-1).astype(jnp.float32)
    wpw_flat = w_pointwise.reshape(cout, cin).reshape(-1).astype(jnp.float32)

    kernel = functools.partial(
        _sepconv_kernel, cin=cin, cout=cout, k=k, s=s, d=d, th=th, w_out=w_out
    )

    out_flat = pl.pallas_call(
        kernel,
        out_shape=jax.ShapeDtypeStruct((n, h_out_pad, cout * w_out), x_nchw.dtype),
        grid_spec=pltpu.PrefetchScalarGridSpec(
            num_scalar_prefetch=0,
            grid=(n, n_t),
            in_specs=[
                # full padded image per batch element; block index ignores the row-tile
                # axis so the image stays resident and is only re-fetched when b changes
                pl.BlockSpec((1, cin, hp, wp), lambda b, i: (b, 0, 0, 0)),
                pl.BlockSpec(memory_space=pltpu.MemorySpace.SMEM),
                pl.BlockSpec(memory_space=pltpu.MemorySpace.SMEM),
            ],
            out_specs=pl.BlockSpec((1, th, cout * w_out), lambda b, i: (b, i, 0)),
        ),
        compiler_params=pltpu.CompilerParams(
            dimension_semantics=("parallel", "parallel")),
    )(x_pad, wdw_flat, wpw_flat)

    # glue: drop padded rows, split the lane-dense (Cout*W_out) axis, back to NCHW
    out = out_flat[:, :h_out, :].reshape(n, h_out, cout, w_out)
    return jnp.transpose(out, (0, 2, 1, 3))


# ---------------------------------------------------------------------------
# Pure-JAX reference (lax conv, NCHW, exactly matching PyTorch semantics)
# ---------------------------------------------------------------------------
def _reference(x_nchw, w_depthwise, w_pointwise, *, k, s=1, p="same", d=1):
    cin = x_nchw.shape[1]
    pad = getpadding(k, s, p, d)
    dw = lax.conv_general_dilated(
        x_nchw, w_depthwise,
        window_strides=(s, s), padding=((pad, pad), (pad, pad)),
        rhs_dilation=(d, d), feature_group_count=cin,
        dimension_numbers=("NCHW", "OIHW", "NCHW"),
    )
    pw = lax.conv_general_dilated(
        dw, w_pointwise,
        window_strides=(1, 1), padding=((0, 0), (0, 0)),
        dimension_numbers=("NCHW", "OIHW", "NCHW"),
    )
    return pw


if __name__ == "__main__":
    # module config: SeperableConv2d(in_chans=4, out_chans=8, k=3, s=1, p='same', d=1)
    in_chans, out_chans, k, s, p, d = 4, 8, 3, 1, "same", 1
    N, H, W = 2, 16, 16

    key = jax.random.PRNGKey(0)
    kx, kdw, kpw = jax.random.split(key, 3)

    x = jax.random.normal(kx, (N, in_chans, H, W), dtype=jnp.float32)
    # deterministic synthetic weights (PyTorch parameter shapes)
    w_dw = jax.random.normal(kdw, (in_chans, 1, k, k), dtype=jnp.float32) * 0.1
    w_pw = jax.random.normal(kpw, (out_chans, in_chans, 1, 1), dtype=jnp.float32) * 0.1

    out = seperable_conv2d(x, w_dw, w_pw, k=k, s=s, p=p, d=d)
    out = jax.block_until_ready(out)

    ref = _reference(x, w_dw, w_pw, k=k, s=s, p=p, d=d)
    assert out.shape == ref.shape, (out.shape, ref.shape)
    np.testing.assert_allclose(np.asarray(out), np.asarray(ref), rtol=1e-4, atol=1e-4)

    print("KERNEL_OK")
</pallas_src>

<mosaic_0001>
module attributes {stable_mosaic.version = 11 : i64} {
  func.func @_sepconv_kernel(%arg0: i32, %arg1: i32, %arg2: memref<1x4x18x18xf32, #tpu.memory_space<vmem>>, %arg3: memref<36xf32, #tpu.memory_space<smem>>, %arg4: memref<32xf32, #tpu.memory_space<smem>>, %arg5: memref<1x8x128xf32, #tpu.memory_space<vmem>>) attributes {dimension_semantics = [#tpu.dimension_semantics<parallel>, #tpu.dimension_semantics<parallel>], iteration_bounds = array<i64: 2, 2>, scalar_prefetch = 0 : i64, scratch_operands = 0 : i64, tpu.core_type = #tpu.core_type<tc>, window_params = [{transform_indices = @transform_0, window_bounds = array<i64: 1, 4, 18, 18>}, {transform_indices = @transform_1, window_bounds = array<i64: 36>}, {transform_indices = @transform_2, window_bounds = array<i64: 32>}, {transform_indices = @transform_3, window_bounds = array<i64: 1, 8, 128>}]} {
    %c8_i32 = arith.constant 8 : i32
    %0 = arith.muli %arg1, %c8_i32 : i32
    %1 = tpu.assume_multiple %0, 8 : i32
    %c0_i32 = arith.constant 0 : i32
    %2 = arith.addi %1, %c0_i32 : i32
    %c0 = arith.constant 0 : index
    %c0_0 = arith.constant 0 : index
    %3 = arith.index_cast %2 : i32 to index
    %c0_1 = arith.constant 0 : index
    %4 = vector.load %arg2[%c0, %c0_0, %3, %c0_1] : memref<1x4x18x18xf32, #tpu.memory_space<vmem>>, vector<1x1x8x16xf32>
    %5 = vector.shape_cast %4 : vector<1x1x8x16xf32> to vector<8x16xf32>
    %c0_2 = arith.constant 0 : index
    %6 = memref.load %arg3[%c0_2] : memref<36xf32, #tpu.memory_space<smem>>
    %7 = vector.broadcast %6 : f32 to vector<8x16xf32>
    %8 = arith.mulf %5, %7 : vector<8x16xf32>
    %c0_i32_3 = arith.constant 0 : i32
    %9 = arith.addi %1, %c0_i32_3 : i32
    %c0_4 = arith.constant 0 : index
    %c0_5 = arith.constant 0 : index
    %10 = arith.index_cast %9 : i32 to index
    %c1 = arith.constant 1 : index
    %11 = vector.load %arg2[%c0_4, %c0_5, %10, %c1] : memref<1x4x18x18xf32, #tpu.memory_space<vmem>>, vector<1x1x8x16xf32>
    %12 = vector.shape_cast %11 : vector<1x1x8x16xf32> to vector<8x16xf32>
    %c1_6 = arith.constant 1 : index
    %13 = memref.load %arg3[%c1_6] : memref<36xf32, #tpu.memory_space<smem>>
    %14 = vector.broadcast %13 : f32 to vector<8x16xf32>
    %15 = arith.mulf %12, %14 : vector<8x16xf32>
    %16 = arith.addf %8, %15 : vector<8x16xf32>
    %c0_i32_7 = arith.constant 0 : i32
    %17 = arith.addi %1, %c0_i32_7 : i32
    %c0_8 = arith.constant 0 : index
    %c0_9 = arith.constant 0 : index
    %18 = arith.index_cast %17 : i32 to index
    %c2 = arith.constant 2 : index
    %19 = vector.load %arg2[%c0_8, %c0_9, %18, %c2] : memref<1x4x18x18xf32, #tpu.memory_space<vmem>>, vector<1x1x8x16xf32>
    %20 = vector.shape_cast %19 : vector<1x1x8x16xf32> to vector<8x16xf32>
    %c2_10 = arith.constant 2 : index
    %21 = memref.load %arg3[%c2_10] : memref<36xf32, #tpu.memory_space<smem>>
    %22 = vector.broadcast %21 : f32 to vector<8x16xf32>
    %23 = arith.mulf %20, %22 : vector<8x16xf32>
    %24 = arith.addf %16, %23 : vector<8x16xf32>
    %c1_i32 = arith.constant 1 : i32
    %25 = arith.addi %1, %c1_i32 : i32
    %c0_11 = arith.constant 0 : index
    %c0_12 = arith.constant 0 : index
    %26 = arith.index_cast %25 : i32 to index
    %c0_13 = arith.constant 0 : index
    %27 = vector.load %arg2[%c0_11, %c0_12, %26, %c0_13] : memref<1x4x18x18xf32, #tpu.memory_space<vmem>>, vector<1x1x8x16xf32>
    %28 = vector.shape_cast %27 : vector<1x1x8x16xf32> to vector<8x16xf32>
    %c3 = arith.constant 3 : index
    %29 = memref.load %arg3[%c3] : memref<36xf32, #tpu.memory_space<smem>>
    %30 = vector.broadcast %29 : f32 to vector<8x16xf32>
    %31 = arith.mulf %28, %30 : vector<8x16xf32>
    %32 = arith.addf %24, %31 : vector<8x16xf32>
    %c1_i32_14 = arith.constant 1 : i32
    %33 = arith.addi %1, %c1_i32_14 : i32
    %c0_15 = arith.constant 0 : index
    %c0_16 = arith.constant 0 : index
    %34 = arith.index_cast %33 : i32 to index
    %c1_17 = arith.constant 1 : index
    %35 = vector.load %arg2[%c0_15, %c0_16, %34, %c1_17] : memref<1x4x18x18xf32, #tpu.memory_space<vmem>>, vector<1x1x8x16xf32>
    %36 = vector.shape_cast %35 : vector<1x1x8x16xf32> to vector<8x16xf32>
    %c4 = arith.constant 4 : index
    %37 = memref.load %arg3[%c4] : memref<36xf32, #tpu.memory_space<smem>>
    %38 = vector.broadcast %37 : f32 to vector<8x16xf32>
    %39 = arith.mulf %36, %38 : vector<8x16xf32>
    %40 = arith.addf %32, %39 : vector<8x16xf32>
    %c1_i32_18 = arith.constant 1 : i32
    %41 = arith.addi %1, %c1_i32_18 : i32
    %c0_19 = arith.constant 0 : index
    %c0_20 = arith.constant 0 : index
    %42 = arith.index_cast %41 : i32 to index
    %c2_21 = arith.constant 2 : index
    %43 = vector.load %arg2[%c0_19, %c0_20, %42, %c2_21] : memref<1x4x18x18xf32, #tpu.memory_space<vmem>>, vector<1x1x8x16xf32>
    %44 = vector.shape_cast %43 : vector<1x1x8x16xf32> to vector<8x16xf32>
    %c5 = arith.constant 5 : index
    %45 = memref.load %arg3[%c5] : memref<36xf32, #tpu.memory_space<smem>>
    %46 = vector.broadcast %45 : f32 to vector<8x16xf32>
    %47 = arith.mulf %44, %46 : vector<8x16xf32>
    %48 = arith.addf %40, %47 : vector<8x16xf32>
    %c2_i32 = arith.constant 2 : i32
    %49 = arith.addi %1, %c2_i32 : i32
    %c0_22 = arith.constant 0 : index
    %c0_23 = arith.constant 0 : index
    %50 = arith.index_cast %49 : i32 to index
    %c0_24 = arith.constant 0 : index
    %51 = vector.load %arg2[%c0_22, %c0_23, %50, %c0_24] : memref<1x4x18x18xf32, #tpu.memory_space<vmem>>, vector<1x1x8x16xf32>
    %52 = vector.shape_cast %51 : vector<1x1x8x16xf32> to vector<8x16xf32>
    %c6 = arith.constant 6 : index
    %53 = memref.load %arg3[%c6] : memref<36xf32, #tpu.memory_space<smem>>
    %54 = vector.broadcast %53 : f32 to vector<8x16xf32>
    %55 = arith.mulf %52, %54 : vector<8x16xf32>
    %56 = arith.addf %48, %55 : vector<8x16xf32>
    %c2_i32_25 = arith.constant 2 : i32
    %57 = arith.addi %1, %c2_i32_25 : i32
    %c0_26 = arith.constant 0 : index
    %c0_27 = arith.constant 0 : index
    %58 = arith.index_cast %57 : i32 to index
    %c1_28 = arith.constant 1 : index
    %59 = vector.load %arg2[%c0_26, %c0_27, %58, %c1_28] : memref<1x4x18x18xf32, #tpu.memory_space<vmem>>, vector<1x1x8x16xf32>
    %60 = vector.shape_cast %59 : vector<1x1x8x16xf32> to vector<8x16xf32>
    %c7 = arith.constant 7 : index
    %61 = memref.load %arg3[%c7] : memref<36xf32, #tpu.memory_space<smem>>
    %62 = vector.broadcast %61 : f32 to vector<8x16xf32>
    %63 = arith.mulf %60, %62 : vector<8x16xf32>
    %64 = arith.addf %56, %63 : vector<8x16xf32>
    %c2_i32_29 = arith.constant 2 : i32
    %65 = arith.addi %1, %c2_i32_29 : i32
    %c0_30 = arith.constant 0 : index
    %c0_31 = arith.constant 0 : index
    %66 = arith.index_cast %65 : i32 to index
    %c2_32 = arith.constant 2 : index
    %67 = vector.load %arg2[%c0_30, %c0_31, %66, %c2_32] : memref<1x4x18x18xf32, #tpu.memory_space<vmem>>, vector<1x1x8x16xf32>
    %68 = vector.shape_cast %67 : vector<1x1x8x16xf32> to vector<8x16xf32>
    %c8 = arith.constant 8 : index
    %69 = memref.load %arg3[%c8] : memref<36xf32, #tpu.memory_space<smem>>
    %70 = vector.broadcast %69 : f32 to vector<8x16xf32>
    %71 = arith.mulf %68, %70 : vector<8x16xf32>
    %72 = arith.addf %64, %71 : vector<8x16xf32>
    %c0_i32_33 = arith.constant 0 : i32
    %73 = arith.addi %1, %c0_i32_33 : i32
    %c0_34 = arith.constant 0 : index
    %c1_35 = arith.constant 1 : index
    %74 = arith.index_cast %73 : i32 to index
    %c0_36 = arith.constant 0 : index
    %75 = vector.load %arg2[%c0_34, %c1_35, %74, %c0_36] : memref<1x4x18x18xf32, #tpu.memory_space<vmem>>, vector<1x1x8x16xf32>
    %76 = vector.shape_cast %75 : vector<1x1x8x16xf32> to vector<8x16xf32>
    %c9 = arith.constant 9 : index
    %77 = memref.load %arg3[%c9] : memref<36xf32, #tpu.memory_space<smem>>
    %78 = vector.broadcast %77 : f32 to vector<8x16xf32>
    %79 = arith.mulf %76, %78 : vector<8x16xf32>
    %c0_i32_37 = arith.constant 0 : i32
    %80 = arith.addi %1, %c0_i32_37 : i32
    %c0_38 = arith.constant 0 : index
    %c1_39 = arith.constant 1 : index
    %81 = arith.index_cast %80 : i32 to index
    %c1_40 = arith.constant 1 : index
    %82 = vector.load %arg2[%c0_38, %c1_39, %81, %c1_40] : memref<1x4x18x18xf32, #tpu.memory_space<vmem>>, vector<1x1x8x16xf32>
    %83 = vector.shape_cast %82 : vector<1x1x8x16xf32> to vector<8x16xf32>
    %c10 = arith.constant 10 : index
    %84 = memref.load %arg3[%c10] : memref<36xf32, #tpu.memory_space<smem>>
    %85 = vector.broadcast %84 : f32 to vector<8x16xf32>
    %86 = arith.mulf %83, %85 : vector<8x16xf32>
    %87 = arith.addf %79, %86 : vector<8x16xf32>
    %c0_i32_41 = arith.constant 0 : i32
    %88 = arith.addi %1, %c0_i32_41 : i32
    %c0_42 = arith.constant 0 : index
    %c1_43 = arith.constant 1 : index
    %89 = arith.index_cast %88 : i32 to index
    %c2_44 = arith.constant 2 : index
    %90 = vector.load %arg2[%c0_42, %c1_43, %89, %c2_44] : memref<1x4x18x18xf32, #tpu.memory_space<vmem>>, vector<1x1x8x16xf32>
    %91 = vector.shape_cast %90 : vector<1x1x8x16xf32> to vector<8x16xf32>
    %c11 = arith.constant 11 : index
    %92 = memref.load %arg3[%c11] : memref<36xf32, #tpu.memory_space<smem>>
    %93 = vector.broadcast %92 : f32 to vector<8x16xf32>
    %94 = arith.mulf %91, %93 : vector<8x16xf32>
    %95 = arith.addf %87, %94 : vector<8x16xf32>
    %c1_i32_45 = arith.constant 1 : i32
    %96 = arith.addi %1, %c1_i32_45 : i32
    %c0_46 = arith.constant 0 : index
    %c1_47 = arith.constant 1 : index
    %97 = arith.index_cast %96 : i32 to index
    %c0_48 = arith.constant 0 : index
    %98 = vector.load %arg2[%c0_46, %c1_47, %97, %c0_48] : memref<1x4x18x18xf32, #tpu.memory_space<vmem>>, vector<1x1x8x16xf32>
    %99 = vector.shape_cast %98 : vector<1x1x8x16xf32> to vector<8x16xf32>
    %c12 = arith.constant 12 : index
    %100 = memref.load %arg3[%c12] : memref<36xf32, #tpu.memory_space<smem>>
    %101 = vector.broadcast %100 : f32 to vector<8x16xf32>
    %102 = arith.mulf %99, %101 : vector<8x16xf32>
    %103 = arith.addf %95, %102 : vector<8x16xf32>
    %c1_i32_49 = arith.constant 1 : i32
    %104 = arith.addi %1, %c1_i32_49 : i32
    %c0_50 = arith.constant 0 : index
    %c1_51 = arith.constant 1 : index
    %105 = arith.index_cast %104 : i32 to index
    %c1_52 = arith.constant 1 : index
    %106 = vector.load %arg2[%c0_50, %c1_51, %105, %c1_52] : memref<1x4x18x18xf32, #tpu.memory_space<vmem>>, vector<1x1x8x16xf32>
    %107 = vector.shape_cast %106 : vector<1x1x8x16xf32> to vector<8x16xf32>
    %c13 = arith.constant 13 : index
    %108 = memref.load %arg3[%c13] : memref<36xf32, #tpu.memory_space<smem>>
    %109 = vector.broadcast %108 : f32 to vector<8x16xf32>
    %110 = arith.mulf %107, %109 : vector<8x16xf32>
    %111 = arith.addf %103, %110 : vector<8x16xf32>
    %c1_i32_53 = arith.constant 1 : i32
    %112 = arith.addi %1, %c1_i32_53 : i32
    %c0_54 = arith.constant 0 : index
    %c1_55 = arith.constant 1 : index
    %113 = arith.index_cast %112 : i32 to index
    %c2_56 = arith.constant 2 : index
    %114 = vector.load %arg2[%c0_54, %c1_55, %113, %c2_56] : memref<1x4x18x18xf32, #tpu.memory_space<vmem>>, vector<1x1x8x16xf32>
    %115 = vector.shape_cast %114 : vector<1x1x8x16xf32> to vector<8x16xf32>
    %c14 = arith.constant 14 : index
    %116 = memref.load %arg3[%c14] : memref<36xf32, #tpu.memory_space<smem>>
    %117 = vector.broadcast %116 : f32 to vector<8x16xf32>
    %118 = arith.mulf %115, %117 : vector<8x16xf32>
    %119 = arith.addf %111, %118 : vector<8x16xf32>
    %c2_i32_57 = arith.constant 2 : i32
    %120 = arith.addi %1, %c2_i32_57 : i32
    %c0_58 = arith.constant 0 : index
    %c1_59 = arith.constant 1 : index
    %121 = arith.index_cast %120 : i32 to index
    %c0_60 = arith.constant 0 : index
    %122 = vector.load %arg2[%c0_58, %c1_59, %121, %c0_60] : memref<1x4x18x18xf32, #tpu.memory_space<vmem>>, vector<1x1x8x16xf32>
    %123 = vector.shape_cast %122 : vector<1x1x8x16xf32> to vector<8x16xf32>
    %c15 = arith.constant 15 : index
    %124 = memref.load %arg3[%c15] : memref<36xf32, #tpu.memory_space<smem>>
    %125 = vector.broadcast %124 : f32 to vector<8x16xf32>
    %126 = arith.mulf %123, %125 : vector<8x16xf32>
    %127 = arith.addf %119, %126 : vector<8x16xf32>
    %c2_i32_61 = arith.constant 2 : i32
    %128 = arith.addi %1, %c2_i32_61 : i32
    %c0_62 = arith.constant 0 : index
    %c1_63 = arith.constant 1 : index
    %129 = arith.index_cast %128 : i32 to index
    %c1_64 = arith.constant 1 : index
    %130 = vector.load %arg2[%c0_62, %c1_63, %129, %c1_64] : memref<1x4x18x18xf32, #tpu.memory_space<vmem>>, vector<1x1x8x16xf32>
    %131 = vector.shape_cast %130 : vector<1x1x8x16xf32> to vector<8x16xf32>
    %c16 = arith.constant 16 : index
    %132 = memref.load %arg3[%c16] : memref<36xf32, #tpu.memory_space<smem>>
    %133 = vector.broadcast %132 : f32 to vector<8x16xf32>
    %134 = arith.mulf %131, %133 : vector<8x16xf32>
    %135 = arith.addf %127, %134 : vector<8x16xf32>
    %c2_i32_65 = arith.constant 2 : i32
    %136 = arith.addi %1, %c2_i32_65 : i32
    %c0_66 = arith.constant 0 : index
    %c1_67 = arith.constant 1 : index
    %137 = arith.index_cast %136 : i32 to index
    %c2_68 = arith.constant 2 : index
    %138 = vector.load %arg2[%c0_66, %c1_67, %137, %c2_68] : memref<1x4x18x18xf32, #tpu.memory_space<vmem>>, vector<1x1x8x16xf32>
    %139 = vector.shape_cast %138 : vector<1x1x8x16xf32> to vector<8x16xf32>
    %c17 = arith.constant 17 : index
    %140 = memref.load %arg3[%c17] : memref<36xf32, #tpu.memory_space<smem>>
    %141 = vector.broadcast %140 : f32 to vector<8x16xf32>
    %142 = arith.mulf %139, %141 : vector<8x16xf32>
    %143 = arith.addf %135, %142 : vector<8x16xf32>
    %c0_i32_69 = arith.constant 0 : i32
    %144 = arith.addi %1, %c0_i32_69 : i32
    %c0_70 = arith.constant 0 : index
    %c2_71 = arith.constant 2 : index
    %145 = arith.index_cast %144 : i32 to index
    %c0_72 = arith.constant 0 : index
    %146 = vector.load %arg2[%c0_70, %c2_71, %145, %c0_72] : memref<1x4x18x18xf32, #tpu.memory_space<vmem>>, vector<1x1x8x16xf32>
    %147 = vector.shape_cast %146 : vector<1x1x8x16xf32> to vector<8x16xf32>
    %c18 = arith.constant 18 : index
    %148 = memref.load %arg3[%c18] : memref<36xf32, #tpu.memory_space<smem>>
    %149 = vector.broadcast %148 : f32 to vector<8x16xf32>
    %150 = arith.mulf %147, %149 : vector<8x16xf32>
    %c0_i32_73 = arith.constant 0 : i32
    %151 = arith.addi %1, %c0_i32_73 : i32
    %c0_74 = arith.constant 0 : index
    %c2_75 = arith.constant 2 : index
    %152 = arith.index_cast %151 : i32 to index
    %c1_76 = arith.constant 1 : index
    %153 = vector.load %arg2[%c0_74, %c2_75, %152, %c1_76] : memref<1x4x18x18xf32, #tpu.memory_space<vmem>>, vector<1x1x8x16xf32>
    %154 = vector.shape_cast %153 : vector<1x1x8x16xf32> to vector<8x16xf32>
    %c19 = arith.constant 19 : index
    %155 = memref.load %arg3[%c19] : memref<36xf32, #tpu.memory_space<smem>>
    %156 = vector.broadcast %155 : f32 to vector<8x16xf32>
    %157 = arith.mulf %154, %156 : vector<8x16xf32>
    %158 = arith.addf %150, %157 : vector<8x16xf32>
    %c0_i32_77 = arith.constant 0 : i32
    %159 = arith.addi %1, %c0_i32_77 : i32
    %c0_78 = arith.constant 0 : index
    %c2_79 = arith.constant 2 : index
    %160 = arith.index_cast %159 : i32 to index
    %c2_80 = arith.constant 2 : index
    %161 = vector.load %arg2[%c0_78, %c2_79, %160, %c2_80] : memref<1x4x18x18xf32, #tpu.memory_space<vmem>>, vector<1x1x8x16xf32>
    %162 = vector.shape_cast %161 : vector<1x1x8x16xf32> to vector<8x16xf32>
    %c20 = arith.constant 20 : index
    %163 = memref.load %arg3[%c20] : memref<36xf32, #tpu.memory_space<smem>>
    %164 = vector.broadcast %163 : f32 to vector<8x16xf32>
    %165 = arith.mulf %162, %164 : vector<8x16xf32>
    %166 = arith.addf %158, %165 : vector<8x16xf32>
    %c1_i32_81 = arith.constant 1 : i32
    %167 = arith.addi %1, %c1_i32_81 : i32
    %c0_82 = arith.constant 0 : index
    %c2_83 = arith.constant 2 : index
    %168 = arith.index_cast %167 : i32 to index
    %c0_84 = arith.constant 0 : index
    %169 = vector.load %arg2[%c0_82, %c2_83, %168, %c0_84] : memref<1x4x18x18xf32, #tpu.memory_space<vmem>>, vector<1x1x8x16xf32>
    %170 = vector.shape_cast %169 : vector<1x1x8x16xf32> to vector<8x16xf32>
    %c21 = arith.constant 21 : index
    %171 = memref.load %arg3[%c21] : memref<36xf32, #tpu.memory_space<smem>>
    %172 = vector.broadcast %171 : f32 to vector<8x16xf32>
    %173 = arith.mulf %170, %172 : vector<8x16xf32>
    %174 = arith.addf %166, %173 : vector<8x16xf32>
    %c1_i32_85 = arith.constant 1 : i32
    %175 = arith.addi %1, %c1_i32_85 : i32
    %c0_86 = arith.constant 0 : index
    %c2_87 = arith.constant 2 : index
    %176 = arith.index_cast %175 : i32 to index
    %c1_88 = arith.constant 1 : index
    %177 = vector.load %arg2[%c0_86, %c2_87, %176, %c1_88] : memref<1x4x18x18xf32, #tpu.memory_space<vmem>>, vector<1x1x8x16xf32>
    %178 = vector.shape_cast %177 : vector<1x1x8x16xf32> to vector<8x16xf32>
    %c22 = arith.constant 22 : index
    %179 = memref.load %arg3[%c22] : memref<36xf32, #tpu.memory_space<smem>>
    %180 = vector.broadcast %179 : f32 to vector<8x16xf32>
    %181 = arith.mulf %178, %180 : vector<8x16xf32>
    %182 = arith.addf %174, %181 : vector<8x16xf32>
    %c1_i32_89 = arith.constant 1 : i32
    %183 = arith.addi %1, %c1_i32_89 : i32
    %c0_90 = arith.constant 0 : index
    %c2_91 = arith.constant 2 : index
    %184 = arith.index_cast %183 : i32 to index
    %c2_92 = arith.constant 2 : index
    %185 = vector.load %arg2[%c0_90, %c2_91, %184, %c2_92] : memref<1x4x18x18xf32, #tpu.memory_space<vmem>>, vector<1x1x8x16xf32>
    %186 = vector.shape_cast %185 : vector<1x1x8x16xf32> to vector<8x16xf32>
    %c23 = arith.constant 23 : index
    %187 = memref.load %arg3[%c23] : memref<36xf32, #tpu.memory_space<smem>>
    %188 = vector.broadcast %187 : f32 to vector<8x16xf32>
    %189 = arith.mulf %186, %188 : vector<8x16xf32>
    %190 = arith.addf %182, %189 : vector<8x16xf32>
    %c2_i32_93 = arith.constant 2 : i32
    %191 = arith.addi %1, %c2_i32_93 : i32
    %c0_94 = arith.constant 0 : index
    %c2_95 = arith.constant 2 : index
    %192 = arith.index_cast %191 : i32 to index
    %c0_96 = arith.constant 0 : index
    %193 = vector.load %arg2[%c0_94, %c2_95, %192, %c0_96] : memref<1x4x18x18xf32, #tpu.memory_space<vmem>>, vector<1x1x8x16xf32>
    %194 = vector.shape_cast %193 : vector<1x1x8x16xf32> to vector<8x16xf32>
    %c24 = arith.constant 24 : index
    %195 = memref.load %arg3[%c24] : memref<36xf32, #tpu.memory_space<smem>>
    %196 = vector.broadcast %195 : f32 to vector<8x16xf32>
    %197 = arith.mulf %194, %196 : vector<8x16xf32>
    %198 = arith.addf %190, %197 : vector<8x16xf32>
    %c2_i32_97 = arith.constant 2 : i32
    %199 = arith.addi %1, %c2_i32_97 : i32
    %c0_98 = arith.constant 0 : index
    %c2_99 = arith.constant 2 : index
    %200 = arith.index_cast %199 : i32 to index
    %c1_100 = arith.constant 1 : index
    %201 = vector.load %arg2[%c0_98, %c2_99, %200, %c1_100] : memref<1x4x18x18xf32, #tpu.memory_space<vmem>>, vector<1x1x8x16xf32>
    %202 = vector.shape_cast %201 : vector<1x1x8x16xf32> to vector<8x16xf32>
    %c25 = arith.constant 25 : index
    %203 = memref.load %arg3[%c25] : memref<36xf32, #tpu.memory_space<smem>>
    %204 = vector.broadcast %203 : f32 to vector<8x16xf32>
    %205 = arith.mulf %202, %204 : vector<8x16xf32>
    %206 = arith.addf %198, %205 : vector<8x16xf32>
    %c2_i32_101 = arith.constant 2 : i32
    %207 = arith.addi %1, %c2_i32_101 : i32
    %c0_102 = arith.constant 0 : index
    %c2_103 = arith.constant 2 : index
    %208 = arith.index_cast %207 : i32 to index
    %c2_104 = arith.constant 2 : index
    %209 = vector.load %arg2[%c0_102, %c2_103, %208, %c2_104] : memref<1x4x18x18xf32, #tpu.memory_space<vmem>>, vector<1x1x8x16xf32>
    %210 = vector.shape_cast %209 : vector<1x1x8x16xf32> to vector<8x16xf32>
    %c26 = arith.constant 26 : index
    %211 = memref.load %arg3[%c26] : memref<36xf32, #tpu.memory_space<smem>>
    %212 = vector.broadcast %211 : f32 to vector<8x16xf32>
    %213 = arith.mulf %210, %212 : vector<8x16xf32>
    %214 = arith.addf %206, %213 : vector<8x16xf32>
    %c0_i32_105 = arith.constant 0 : i32
    %215 = arith.addi %1, %c0_i32_105 : i32
    %c0_106 = arith.constant 0 : index
    %c3_107 = arith.constant 3 : index
    %216 = arith.index_cast %215 : i32 to index
    %c0_108 = arith.constant 0 : index
    %217 = vector.load %arg2[%c0_106, %c3_107, %216, %c0_108] : memref<1x4x18x18xf32, #tpu.memory_space<vmem>>, vector<1x1x8x16xf32>
    %218 = vector.shape_cast %217 : vector<1x1x8x16xf32> to vector<8x16xf32>
    %c27 = arith.constant 27 : index
    %219 = memref.load %arg3[%c27] : memref<36xf32, #tpu.memory_space<smem>>
    %220 = vector.broadcast %219 : f32 to vector<8x16xf32>
    %221 = arith.mulf %218, %220 : vector<8x16xf32>
    %c0_i32_109 = arith.constant 0 : i32
    %222 = arith.addi %1, %c0_i32_109 : i32
    %c0_110 = arith.constant 0 : index
    %c3_111 = arith.constant 3 : index
    %223 = arith.index_cast %222 : i32 to index
    %c1_112 = arith.constant 1 : index
    %224 = vector.load %arg2[%c0_110, %c3_111, %223, %c1_112] : memref<1x4x18x18xf32, #tpu.memory_space<vmem>>, vector<1x1x8x16xf32>
    %225 = vector.shape_cast %224 : vector<1x1x8x16xf32> to vector<8x16xf32>
    %c28 = arith.constant 28 : index
    %226 = memref.load %arg3[%c28] : memref<36xf32, #tpu.memory_space<smem>>
    %227 = vector.broadcast %226 : f32 to vector<8x16xf32>
    %228 = arith.mulf %225, %227 : vector<8x16xf32>
    %229 = arith.addf %221, %228 : vector<8x16xf32>
    %c0_i32_113 = arith.constant 0 : i32
    %230 = arith.addi %1, %c0_i32_113 : i32
    %c0_114 = arith.constant 0 : index
    %c3_115 = arith.constant 3 : index
    %231 = arith.index_cast %230 : i32 to index
    %c2_116 = arith.constant 2 : index
    %232 = vector.load %arg2[%c0_114, %c3_115, %231, %c2_116] : memref<1x4x18x18xf32, #tpu.memory_space<vmem>>, vector<1x1x8x16xf32>
    %233 = vector.shape_cast %232 : vector<1x1x8x16xf32> to vector<8x16xf32>
    %c29 = arith.constant 29 : index
    %234 = memref.load %arg3[%c29] : memref<36xf32, #tpu.memory_space<smem>>
    %235 = vector.broadcast %234 : f32 to vector<8x16xf32>
    %236 = arith.mulf %233, %235 : vector<8x16xf32>
    %237 = arith.addf %229, %236 : vector<8x16xf32>
    %c1_i32_117 = arith.constant 1 : i32
    %238 = arith.addi %1, %c1_i32_117 : i32
    %c0_118 = arith.constant 0 : index
    %c3_119 = arith.constant 3 : index
    %239 = arith.index_cast %238 : i32 to index
    %c0_120 = arith.constant 0 : index
    %240 = vector.load %arg2[%c0_118, %c3_119, %239, %c0_120] : memref<1x4x18x18xf32, #tpu.memory_space<vmem>>, vector<1x1x8x16xf32>
    %241 = vector.shape_cast %240 : vector<1x1x8x16xf32> to vector<8x16xf32>
    %c30 = arith.constant 30 : index
    %242 = memref.load %arg3[%c30] : memref<36xf32, #tpu.memory_space<smem>>
    %243 = vector.broadcast %242 : f32 to vector<8x16xf32>
    %244 = arith.mulf %241, %243 : vector<8x16xf32>
    %245 = arith.addf %237, %244 : vector<8x16xf32>
    %c1_i32_121 = arith.constant 1 : i32
    %246 = arith.addi %1, %c1_i32_121 : i32
    %c0_122 = arith.constant 0 : index
    %c3_123 = arith.constant 3 : index
    %247 = arith.index_cast %246 : i32 to index
    %c1_124 = arith.constant 1 : index
    %248 = vector.load %arg2[%c0_122, %c3_123, %247, %c1_124] : memref<1x4x18x18xf32, #tpu.memory_space<vmem>>, vector<1x1x8x16xf32>
    %249 = vector.shape_cast %248 : vector<1x1x8x16xf32> to vector<8x16xf32>
    %c31 = arith.constant 31 : index
    %250 = memref.load %arg3[%c31] : memref<36xf32, #tpu.memory_space<smem>>
    %251 = vector.broadcast %250 : f32 to vector<8x16xf32>
    %252 = arith.mulf %249, %251 : vector<8x16xf32>
    %253 = arith.addf %245, %252 : vector<8x16xf32>
    %c1_i32_125 = arith.constant 1 : i32
    %254 = arith.addi %1, %c1_i32_125 : i32
    %c0_126 = arith.constant 0 : index
    %c3_127 = arith.constant 3 : index
    %255 = arith.index_cast %254 : i32 to index
    %c2_128 = arith.constant 2 : index
    %256 = vector.load %arg2[%c0_126, %c3_127, %255, %c2_128] : memref<1x4x18x18xf32, #tpu.memory_space<vmem>>, vector<1x1x8x16xf32>
    %257 = vector.shape_cast %256 : vector<1x1x8x16xf32> to vector<8x16xf32>
    %c32 = arith.constant 32 : index
    %258 = memref.load %arg3[%c32] : memref<36xf32, #tpu.memory_space<smem>>
    %259 = vector.broadcast %258 : f32 to vector<8x16xf32>
    %260 = arith.mulf %257, %259 : vector<8x16xf32>
    %261 = arith.addf %253, %260 : vector<8x16xf32>
    %c2_i32_129 = arith.constant 2 : i32
    %262 = arith.addi %1, %c2_i32_129 : i32
    %c0_130 = arith.constant 0 : index
    %c3_131 = arith.constant 3 : index
    %263 = arith.index_cast %262 : i32 to index
    %c0_132 = arith.constant 0 : index
    %264 = vector.load %arg2[%c0_130, %c3_131, %263, %c0_132] : memref<1x4x18x18xf32, #tpu.memory_space<vmem>>, vector<1x1x8x16xf32>
    %265 = vector.shape_cast %264 : vector<1x1x8x16xf32> to vector<8x16xf32>
    %c33 = arith.constant 33 : index
    %266 = memref.load %arg3[%c33] : memref<36xf32, #tpu.memory_space<smem>>
    %267 = vector.broadcast %266 : f32 to vector<8x16xf32>
    %268 = arith.mulf %265, %267 : vector<8x16xf32>
    %269 = arith.addf %261, %268 : vector<8x16xf32>
    %c2_i32_133 = arith.constant 2 : i32
    %270 = arith.addi %1, %c2_i32_133 : i32
    %c0_134 = arith.constant 0 : index
    %c3_135 = arith.constant 3 : index
    %271 = arith.index_cast %270 : i32 to index
    %c1_136 = arith.constant 1 : index
    %272 = vector.load %arg2[%c0_134, %c3_135, %271, %c1_136] : memref<1x4x18x18xf32, #tpu.memory_space<vmem>>, vector<1x1x8x16xf32>
    %273 = vector.shape_cast %272 : vector<1x1x8x16xf32> to vector<8x16xf32>
    %c34 = arith.constant 34 : index
    %274 = memref.load %arg3[%c34] : memref<36xf32, #tpu.memory_space<smem>>
    %275 = vector.broadcast %274 : f32 to vector<8x16xf32>
    %276 = arith.mulf %273, %275 : vector<8x16xf32>
    %277 = arith.addf %269, %276 : vector<8x16xf32>
    %c2_i32_137 = arith.constant 2 : i32
    %278 = arith.addi %1, %c2_i32_137 : i32
    %c0_138 = arith.constant 0 : index
    %c3_139 = arith.constant 3 : index
    %279 = arith.index_cast %278 : i32 to index
    %c2_140 = arith.constant 2 : index
    %280 = vector.load %arg2[%c0_138, %c3_139, %279, %c2_140] : memref<1x4x18x18xf32, #tpu.memory_space<vmem>>, vector<1x1x8x16xf32>
    %281 = vector.shape_cast %280 : vector<1x1x8x16xf32> to vector<8x16xf32>
    %c35 = arith.constant 35 : index
    %282 = memref.load %arg3[%c35] : memref<36xf32, #tpu.memory_space<smem>>
    %283 = vector.broadcast %282 : f32 to vector<8x16xf32>
    %284 = arith.mulf %281, %283 : vector<8x16xf32>
    %285 = arith.addf %277, %284 : vector<8x16xf32>
    %c0_141 = arith.constant 0 : index
    %286 = memref.load %arg4[%c0_141] : memref<32xf32, #tpu.memory_space<smem>>
    %287 = vector.broadcast %286 : f32 to vector<8x16xf32>
    %288 = arith.mulf %72, %287 : vector<8x16xf32>
    %c1_142 = arith.constant 1 : index
    %289 = memref.load %arg4[%c1_142] : memref<32xf32, #tpu.memory_space<smem>>
    %290 = vector.broadcast %289 : f32 to vector<8x16xf32>
    %291 = arith.mulf %143, %290 : vector<8x16xf32>
    %292 = arith.addf %288, %291 : vector<8x16xf32>
    %c2_143 = arith.constant 2 : index
    %293 = memref.load %arg4[%c2_143] : memref<32xf32, #tpu.memory_space<smem>>
    %294 = vector.broadcast %293 : f32 to vector<8x16xf32>
    %295 = arith.mulf %214, %294 : vector<8x16xf32>
    %296 = arith.addf %292, %295 : vector<8x16xf32>
    %c3_144 = arith.constant 3 : index
    %297 = memref.load %arg4[%c3_144] : memref<32xf32, #tpu.memory_space<smem>>
    %298 = vector.broadcast %297 : f32 to vector<8x16xf32>
    %299 = arith.mulf %285, %298 : vector<8x16xf32>
    %300 = arith.addf %296, %299 : vector<8x16xf32>
    %c0_145 = arith.constant 0 : index
    %c0_146 = arith.constant 0 : index
    %c0_147 = arith.constant 0 : index
    %301 = vector.load %arg5[%c0_145, %c0_146, %c0_147] : memref<1x8x128xf32, #tpu.memory_space<vmem>>, vector<1x8x16xf32>
    %302 = vector.shape_cast %301 : vector<1x8x16xf32> to vector<8x16xf32>
    %303 = vector.shape_cast %300 : vector<8x16xf32> to vector<1x8x16xf32>
    tpu.vector_store %arg5[%c0_145, %c0_146, %c0_147], %303 {strides = array<i32>} : memref<1x8x128xf32, #tpu.memory_space<vmem>>, vector<1x8x16xf32>,
    %c4_148 = arith.constant 4 : index
    %304 = memref.load %arg4[%c4_148] : memref<32xf32, #tpu.memory_space<smem>>
    %305 = vector.broadcast %304 : f32 to vector<8x16xf32>
    %306 = arith.mulf %72, %305 : vector<8x16xf32>
    %c5_149 = arith.constant 5 : index
    %307 = memref.load %arg4[%c5_149] : memref<32xf32, #tpu.memory_space<smem>>
    %308 = vector.broadcast %307 : f32 to vector<8x16xf32>
    %309 = arith.mulf %143, %308 : vector<8x16xf32>
    %310 = arith.addf %306, %309 : vector<8x16xf32>
    %c6_150 = arith.constant 6 : index
    %311 = memref.load %arg4[%c6_150] : memref<32xf32, #tpu.memory_space<smem>>
    %312 = vector.broadcast %311 : f32 to vector<8x16xf32>
    %313 = arith.mulf %214, %312 : vector<8x16xf32>
    %314 = arith.addf %310, %313 : vector<8x16xf32>
    %c7_151 = arith.constant 7 : index
    %315 = memref.load %arg4[%c7_151] : memref<32xf32, #tpu.memory_space<smem>>
    %316 = vector.broadcast %315 : f32 to vector<8x16xf32>
    %317 = arith.mulf %285, %316 : vector<8x16xf32>
    %318 = arith.addf %314, %317 : vector<8x16xf32>
    %c0_152 = arith.constant 0 : index
    %c0_153 = arith.constant 0 : index
    %c16_154 = arith.constant 16 : index
    %319 = vector.load %arg5[%c0_152, %c0_153, %c16_154] : memref<1x8x128xf32, #tpu.memory_space<vmem>>, vector<1x8x16xf32>
    %320 = vector.shape_cast %319 : vector<1x8x16xf32> to vector<8x16xf32>
    %321 = vector.shape_cast %318 : vector<8x16xf32> to vector<1x8x16xf32>
    tpu.vector_store %arg5[%c0_152, %c0_153, %c16_154], %321 {strides = array<i32>} : memref<1x8x128xf32, #tpu.memory_space<vmem>>, vector<1x8x16xf32>,
    %c8_155 = arith.constant 8 : index
    %322 = memref.load %arg4[%c8_155] : memref<32xf32, #tpu.memory_space<smem>>
    %323 = vector.broadcast %322 : f32 to vector<8x16xf32>
    %324 = arith.mulf %72, %323 : vector<8x16xf32>
    %c9_156 = arith.constant 9 : index
    %325 = memref.load %arg4[%c9_156] : memref<32xf32, #tpu.memory_space<smem>>
    %326 = vector.broadcast %325 : f32 to vector<8x16xf32>
    %327 = arith.mulf %143, %326 : vector<8x16xf32>
    %328 = arith.addf %324, %327 : vector<8x16xf32>
    %c10_157 = arith.constant 10 : index
    %329 = memref.load %arg4[%c10_157] : memref<32xf32, #tpu.memory_space<smem>>
    %330 = vector.broadcast %329 : f32 to vector<8x16xf32>
    %331 = arith.mulf %214, %330 : vector<8x16xf32>
    %332 = arith.addf %328, %331 : vector<8x16xf32>
    %c11_158 = arith.constant 11 : index
    %333 = memref.load %arg4[%c11_158] : memref<32xf32, #tpu.memory_space<smem>>
    %334 = vector.broadcast %333 : f32 to vector<8x16xf32>
    %335 = arith.mulf %285, %334 : vector<8x16xf32>
    %336 = arith.addf %332, %335 : vector<8x16xf32>
    %c0_159 = arith.constant 0 : index
    %c0_160 = arith.constant 0 : index
    %c32_161 = arith.constant 32 : index
    %337 = vector.load %arg5[%c0_159, %c0_160, %c32_161] : memref<1x8x128xf32, #tpu.memory_space<vmem>>, vector<1x8x16xf32>
    %338 = vector.shape_cast %337 : vector<1x8x16xf32> to vector<8x16xf32>
    %339 = vector.shape_cast %336 : vector<8x16xf32> to vector<1x8x16xf32>
    tpu.vector_store %arg5[%c0_159, %c0_160, %c32_161], %339 {strides = array<i32>} : memref<1x8x128xf32, #tpu.memory_space<vmem>>, vector<1x8x16xf32>,
    %c12_162 = arith.constant 12 : index
    %340 = memref.load %arg4[%c12_162] : memref<32xf32, #tpu.memory_space<smem>>
    %341 = vector.broadcast %340 : f32 to vector<8x16xf32>
    %342 = arith.mulf %72, %341 : vector<8x16xf32>
    %c13_163 = arith.constant 13 : index
    %343 = memref.load %arg4[%c13_163] : memref<32xf32, #tpu.memory_space<smem>>
    %344 = vector.broadcast %343 : f32 to vector<8x16xf32>
    %345 = arith.mulf %143, %344 : vector<8x16xf32>
    %346 = arith.addf %342, %345 : vector<8x16xf32>
    %c14_164 = arith.constant 14 : index
    %347 = memref.load %arg4[%c14_164] : memref<32xf32, #tpu.memory_space<smem>>
    %348 = vector.broadcast %347 : f32 to vector<8x16xf32>
    %349 = arith.mulf %214, %348 : vector<8x16xf32>
    %350 = arith.addf %346, %349 : vector<8x16xf32>
    %c15_165 = arith.constant 15 : index
    %351 = memref.load %arg4[%c15_165] : memref<32xf32, #tpu.memory_space<smem>>
    %352 = vector.broadcast %351 : f32 to vector<8x16xf32>
    %353 = arith.mulf %285, %352 : vector<8x16xf32>
    %354 = arith.addf %350, %353 : vector<8x16xf32>
    %c0_166 = arith.constant 0 : index
    %c0_167 = arith.constant 0 : index
    %c48 = arith.constant 48 : index
    %355 = vector.load %arg5[%c0_166, %c0_167, %c48] : memref<1x8x128xf32, #tpu.memory_space<vmem>>, vector<1x8x16xf32>
    %356 = vector.shape_cast %355 : vector<1x8x16xf32> to vector<8x16xf32>
    %357 = vector.shape_cast %354 : vector<8x16xf32> to vector<1x8x16xf32>
    tpu.vector_store %arg5[%c0_166, %c0_167, %c48], %357 {strides = array<i32>} : memref<1x8x128xf32, #tpu.memory_space<vmem>>, vector<1x8x16xf32>,
    %c16_168 = arith.constant 16 : index
    %358 = memref.load %arg4[%c16_168] : memref<32xf32, #tpu.memory_space<smem>>
    %359 = vector.broadcast %358 : f32 to vector<8x16xf32>
    %360 = arith.mulf %72, %359 : vector<8x16xf32>
    %c17_169 = arith.constant 17 : index
    %361 = memref.load %arg4[%c17_169] : memref<32xf32, #tpu.memory_space<smem>>
    %362 = vector.broadcast %361 : f32 to vector<8x16xf32>
    %363 = arith.mulf %143, %362 : vector<8x16xf32>
    %364 = arith.addf %360, %363 : vector<8x16xf32>
    %c18_170 = arith.constant 18 : index
    %365 = memref.load %arg4[%c18_170] : memref<32xf32, #tpu.memory_space<smem>>
    %366 = vector.broadcast %365 : f32 to vector<8x16xf32>
    %367 = arith.mulf %214, %366 : vector<8x16xf32>
    %368 = arith.addf %364, %367 : vector<8x16xf32>
    %c19_171 = arith.constant 19 : index
    %369 = memref.load %arg4[%c19_171] : memref<32xf32, #tpu.memory_space<smem>>
    %370 = vector.broadcast %369 : f32 to vector<8x16xf32>
    %371 = arith.mulf %285, %370 : vector<8x16xf32>
    %372 = arith.addf %368, %371 : vector<8x16xf32>
    %c0_172 = arith.constant 0 : index
    %c0_173 = arith.constant 0 : index
    %c64 = arith.constant 64 : index
    %373 = vector.load %arg5[%c0_172, %c0_173, %c64] : memref<1x8x128xf32, #tpu.memory_space<vmem>>, vector<1x8x16xf32>
    %374 = vector.shape_cast %373 : vector<1x8x16xf32> to vector<8x16xf32>
    %375 = vector.shape_cast %372 : vector<8x16xf32> to vector<1x8x16xf32>
    tpu.vector_store %arg5[%c0_172, %c0_173, %c64], %375 {strides = array<i32>} : memref<1x8x128xf32, #tpu.memory_space<vmem>>, vector<1x8x16xf32>,
    %c20_174 = arith.constant 20 : index
    %376 = memref.load %arg4[%c20_174] : memref<32xf32, #tpu.memory_space<smem>>
    %377 = vector.broadcast %376 : f32 to vector<8x16xf32>
    %378 = arith.mulf %72, %377 : vector<8x16xf32>
    %c21_175 = arith.constant 21 : index
    %379 = memref.load %arg4[%c21_175] : memref<32xf32, #tpu.memory_space<smem>>
    %380 = vector.broadcast %379 : f32 to vector<8x16xf32>
    %381 = arith.mulf %143, %380 : vector<8x16xf32>
    %382 = arith.addf %378, %381 : vector<8x16xf32>
    %c22_176 = arith.constant 22 : index
    %383 = memref.load %arg4[%c22_176] : memref<32xf32, #tpu.memory_space<smem>>
    %384 = vector.broadcast %383 : f32 to vector<8x16xf32>
    %385 = arith.mulf %214, %384 : vector<8x16xf32>
    %386 = arith.addf %382, %385 : vector<8x16xf32>
    %c23_177 = arith.constant 23 : index
    %387 = memref.load %arg4[%c23_177] : memref<32xf32, #tpu.memory_space<smem>>
    %388 = vector.broadcast %387 : f32 to vector<8x16xf32>
    %389 = arith.mulf %285, %388 : vector<8x16xf32>
    %390 = arith.addf %386, %389 : vector<8x16xf32>
    %c0_178 = arith.constant 0 : index
    %c0_179 = arith.constant 0 : index
    %c80 = arith.constant 80 : index
    %391 = vector.load %arg5[%c0_178, %c0_179, %c80] : memref<1x8x128xf32, #tpu.memory_space<vmem>>, vector<1x8x16xf32>
    %392 = vector.shape_cast %391 : vector<1x8x16xf32> to vector<8x16xf32>
    %393 = vector.shape_cast %390 : vector<8x16xf32> to vector<1x8x16xf32>
    tpu.vector_store %arg5[%c0_178, %c0_179, %c80], %393 {strides = array<i32>} : memref<1x8x128xf32, #tpu.memory_space<vmem>>, vector<1x8x16xf32>,
    %c24_180 = arith.constant 24 : index
    %394 = memref.load %arg4[%c24_180] : memref<32xf32, #tpu.memory_space<smem>>
    %395 = vector.broadcast %394 : f32 to vector<8x16xf32>
    %396 = arith.mulf %72, %395 : vector<8x16xf32>
    %c25_181 = arith.constant 25 : index
    %397 = memref.load %arg4[%c25_181] : memref<32xf32, #tpu.memory_space<smem>>
    %398 = vector.broadcast %397 : f32 to vector<8x16xf32>
    %399 = arith.mulf %143, %398 : vector<8x16xf32>
    %400 = arith.addf %396, %399 : vector<8x16xf32>
    %c26_182 = arith.constant 26 : index
    %401 = memref.load %arg4[%c26_182] : memref<32xf32, #tpu.memory_space<smem>>
    %402 = vector.broadcast %401 : f32 to vector<8x16xf32>
    %403 = arith.mulf %214, %402 : vector<8x16xf32>
    %404 = arith.addf %400, %403 : vector<8x16xf32>
    %c27_183 = arith.constant 27 : index
    %405 = memref.load %arg4[%c27_183] : memref<32xf32, #tpu.memory_space<smem>>
    %406 = vector.broadcast %405 : f32 to vector<8x16xf32>
    %407 = arith.mulf %285, %406 : vector<8x16xf32>
    %408 = arith.addf %404, %407 : vector<8x16xf32>
    %c0_184 = arith.constant 0 : index
    %c0_185 = arith.constant 0 : index
    %c96 = arith.constant 96 : index
    %409 = vector.load %arg5[%c0_184, %c0_185, %c96] : memref<1x8x128xf32, #tpu.memory_space<vmem>>, vector<1x8x16xf32>
    %410 = vector.shape_cast %409 : vector<1x8x16xf32> to vector<8x16xf32>
    %411 = vector.shape_cast %408 : vector<8x16xf32> to vector<1x8x16xf32>
    tpu.vector_store %arg5[%c0_184, %c0_185, %c96], %411 {strides = array<i32>} : memref<1x8x128xf32, #tpu.memory_space<vmem>>, vector<1x8x16xf32>,
    %c28_186 = arith.constant 28 : index
    %412 = memref.load %arg4[%c28_186] : memref<32xf32, #tpu.memory_space<smem>>
    %413 = vector.broadcast %412 : f32 to vector<8x16xf32>
    %414 = arith.mulf %72, %413 : vector<8x16xf32>
    %c29_187 = arith.constant 29 : index
    %415 = memref.load %arg4[%c29_187] : memref<32xf32, #tpu.memory_space<smem>>
    %416 = vector.broadcast %415 : f32 to vector<8x16xf32>
    %417 = arith.mulf %143, %416 : vector<8x16xf32>
    %418 = arith.addf %414, %417 : vector<8x16xf32>
    %c30_188 = arith.constant 30 : index
    %419 = memref.load %arg4[%c30_188] : memref<32xf32, #tpu.memory_space<smem>>
    %420 = vector.broadcast %419 : f32 to vector<8x16xf32>
    %421 = arith.mulf %214, %420 : vector<8x16xf32>
    %422 = arith.addf %418, %421 : vector<8x16xf32>
    %c31_189 = arith.constant 31 : index
    %423 = memref.load %arg4[%c31_189] : memref<32xf32, #tpu.memory_space<smem>>
    %424 = vector.broadcast %423 : f32 to vector<8x16xf32>
    %425 = arith.mulf %285, %424 : vector<8x16xf32>
    %426 = arith.addf %422, %425 : vector<8x16xf32>
    %c0_190 = arith.constant 0 : index
    %c0_191 = arith.constant 0 : index
    %c112 = arith.constant 112 : index
    %427 = vector.load %arg5[%c0_190, %c0_191, %c112] : memref<1x8x128xf32, #tpu.memory_space<vmem>>, vector<1x8x16xf32>
    %428 = vector.shape_cast %427 : vector<1x8x16xf32> to vector<8x16xf32>
    %429 = vector.shape_cast %426 : vector<8x16xf32> to vector<1x8x16xf32>
    tpu.vector_store %arg5[%c0_190, %c0_191, %c112], %429 {strides = array<i32>} : memref<1x8x128xf32, #tpu.memory_space<vmem>>, vector<1x8x16xf32>,
    return
  }
  func.func @transform_0(%arg0: i32, %arg1: i32) -> (i32, i32, i32, i32) {
    %c0_i32 = arith.constant 0 : i32
    %c0_i32_0 = arith.constant 0 : i32
    %c0_i32_1 = arith.constant 0 : i32
    %c0_i32_2 = arith.constant 0 : i32
    return %arg0, %c0_i32, %c0_i32_0, %c0_i32_1 : i32, i32, i32, i32
  }
  func.func @transform_1(%arg0: i32, %arg1: i32) -> i32 {
    %c0_i32 = arith.constant 0 : i32
    %c0_i32_0 = arith.constant 0 : i32
    return %c0_i32 : i32
  }
  func.func @transform_2(%arg0: i32, %arg1: i32) -> i32 {
    %c0_i32 = arith.constant 0 : i32
    %c0_i32_0 = arith.constant 0 : i32
    return %c0_i32 : i32
  }
  func.func @transform_3(%arg0: i32, %arg1: i32) -> (i32, i32, i32) {
    %c0_i32 = arith.constant 0 : i32
    %c0_i32_0 = arith.constant 0 : i32
    return %arg0, %arg1, %c0_i32 : i32, i32, i32
  }
}

</mosaic_0001>

<llo_original>
// kernel: tpu_custom_call.1
$region0: #{tpu_custom_call.1}
  #allocation0 [shape = 'u32[]', space=smem, size = 0x4, offset = 0x4, fixed_abs, tag = 'smem constant byte address 0x4 - core index']
  #allocation1 [shape = 'u32[144,128]{1,0:T(1,128)}', space=vmem, size = 0x12000, scoped, tag = 'internal scratch']
  %s0 = inlined_call_operand.vmem [shape: f32[2,4,18,18], index: 0, kind: input, shape index: {}]
  %s1 = inlined_call_operand.vmem [shape: f32[36], index: 1, kind: input, shape index: {}]
  %s2 = inlined_call_operand.vmem [shape: f32[32], index: 2, kind: input, shape index: {}]
  %s3 = inlined_call_operand.hbm [shape: f32[2,16,128], index: 3, kind: output, shape index: {}]
  %s4 = sld [smem:[#allocation0]]
  $region53: #{tpu_custom_call.1} parent=0
    _
  %s6 = ssub.s32 1, %s4
  %s7 = scalar_select 0, %s6, %s4
  $region1: #{tpu_custom_call.1} parent=0
    #allocation2 [shape = 'u8[512]{0}', space=smem, size = 0x200, scoped, tag = 'input window, operand 1, single buffered']
    #allocation3 [shape = 's32[2]{0}', space=sflag, size = 0x8, scoped, tag = 'scoped memory for tpu_custom_call.1']
    #allocation4 [shape = 's32[2]{0}', space=sflag, size = 0x8, scoped, tag = 'scoped memory for tpu_custom_call.1']
    #allocation5 [shape = 'u8[512]{0}', space=smem, size = 0x200, scoped, tag = 'input window, operand 2, single buffered']
    #allocation6 [shape = 's32[1]{0}', space=sflag, size = 0x4, scoped, tag = 'scoped memory for tpu_custom_call.1']
    #allocation7 [shape = 'u8[8192]{0}', space=vmem, size = 0x2000, scoped, tag = 'output window, operand 0']
    %8 = vsyncpa [#allocation4], 0
    %9 = vsyncpa [#allocation6], 0
    %10 = vsyncpa [#allocation3], 0
    %s11 = scalar_lea.sflag [#allocation3], 1
    %12 = vsyncpa %s11, 0
    loop: start=0, step=1, limit=6
    $region2: #{tpu_custom_call.1} parent=1 // loop_pre_header
      _
    $region3: #{tpu_custom_call.1} parent=1 // loop_header
      %s14 = sphi 0, %s18
      %p15 = scmp.ge.s32.totalorder %s14, 6
      %s21 = sphi 0, %s33
      %s22 = sphi 0, %s29
      %s23 = sphi 0, %s21
      %s24 = sphi 0, %s22
      %s25 = sphi 0, %s23
      %s26 = sphi 0, %s24
      %s36 = sphi 0, %s38
      %s39 = sphi 0, %s36
      %s40 = sphi 0, %s39
      %s56 = sphi 0, %s40
      %s60 = sphi 0, %s60
      %s62 = sphi 0, %s60
      %s63 = sphi 0, %s62
      %s77 = sphi 0, %s63
      %s81 = sphi 0, %s81
      %s83 = sphi 0, %s81
      %s84 = sphi 0, %s83
      %s98 = sphi 0, %s84
      %s106 = sphi 0, %s108
      %s109 = sphi 0, %s106
      %s110 = sphi 0, %s109
      %s126 = sphi 0, %s110
    $region4: #{tpu_custom_call.1} parent=1 // loop_header_branch
      %17 = sbr.rel (%p15) target = $region8
    $region5: #{tpu_custom_call.1} parent=1 // loop_body
      %s19 = ssub.s32 %s14, 1
      %s20 = ssub.s32 %s14, 2
      %s27 = sadd.s32 1, %s22
      %p28 = scmp.ge.s32.totalorder %s27, 2
      %s29 = scalar_select %p28, 0, %s27
      %s30 = sadd.s32 1, %s21
      %s31 = scalar_select %p28, %s30, %s21
      %p32 = scmp.ge.s32.totalorder %s31, 2
      %s33 = scalar_select %p32, 0, %s31
      %s34 = ssub.s32 %s21, %s33
      %p35 = scmp.eq.s32.totalorder %s34, 0
      %s37 = sadd.s32 %s36, 1
      %s38 = scalar_select %p35, %s36, %s37
      %p41 = pneg %p35
      %p42 = scmp.eq.s32.totalorder %s14, 3
      %p43 = por %p41, %p42
      %p44 = scmp.ne.s32.totalorder %s36, %s39
      %p45 = scmp.eq.s32.totalorder %s14, 0
      %p46 = por %p44, %p45
      %p47 = scmp.ne.s32.totalorder %s36, %s39
      %p48 = scmp.eq.s32.totalorder %s19, 3
      %p49 = por %p47, %p48
      %p50 = scmp.ne.s32.totalorder %s39, %s40
      %p51 = scmp.eq.s32.totalorder %s19, 0
      %p52 = por %p50, %p51
      %p53 = scmp.ne.s32.totalorder %s39, %s40
      %p54 = scmp.eq.s32.totalorder %s20, 3
      %p55 = por %p53, %p54
      %p57 = scmp.ne.s32.totalorder %s40, %s56
      %p58 = scmp.eq.s32.totalorder %s20, 0
      %p59 = por %p57, %p58
      %s61 = sadd.s32 %s60, 1
      %p64 = scmp.eq.s32.totalorder %s14, 3
      %p65 = scmp.ne.s32.totalorder %s60, %s62
      %p66 = scmp.eq.s32.totalorder %s14, 0
      %p67 = por %p65, %p66
      %p68 = scmp.ne.s32.totalorder %s60, %s62
      %p69 = scmp.eq.s32.totalorder %s19, 3
      %p70 = por %p68, %p69
      %p71 = scmp.ne.s32.totalorder %s62, %s63
      %p72 = scmp.eq.s32.totalorder %s19, 0
      %p73 = por %p71, %p72
      %p74 = scmp.ne.s32.totalorder %s62, %s63
      %p75 = scmp.eq.s32.totalorder %s20, 3
      %p76 = por %p74, %p75
      %p78 = scmp.ne.s32.totalorder %s63, %s77
      %p79 = scmp.eq.s32.totalorder %s20, 0
      %p80 = por %p78, %p79
      %s82 = sadd.s32 %s81, 1
      %p85 = scmp.eq.s32.totalorder %s14, 3
      %p86 = scmp.ne.s32.totalorder %s81, %s83
      %p87 = scmp.eq.s32.totalorder %s14, 0
      %p88 = por %p86, %p87
      %p89 = scmp.ne.s32.totalorder %s81, %s83
      %p90 = scmp.eq.s32.totalorder %s19, 3
      %p91 = por %p89, %p90
      %p92 = scmp.ne.s32.totalorder %s83, %s84
      %p93 = scmp.eq.s32.totalorder %s19, 0
      %p94 = por %p92, %p93
      %p95 = scmp.ne.s32.totalorder %s83, %s84
      %p96 = scmp.eq.s32.totalorder %s20, 3
      %p97 = por %p95, %p96
      %p99 = scmp.ne.s32.totalorder %s84, %s98
      %p100 = scmp.eq.s32.totalorder %s20, 0
      %p101 = por %p99, %p100
      %s102 = ssub.s32 %s21, %s33
      %s103 = ssub.s32 %s22, %s29
      %s104 = sor.u32 %s102, %s103
      %p105 = scmp.eq.s32.totalorder %s104, 0
      %s107 = sadd.s32 %s106, 1
      %s108 = scalar_select %p105, %s106, %s107
      %p111 = pneg %p105
      %p112 = scmp.eq.s32.totalorder %s14, 3
      %p113 = por %p111, %p112
      %p114 = scmp.ne.s32.totalorder %s106, %s109
      %p115 = scmp.eq.s32.totalorder %s14, 0
      %p116 = por %p114, %p115
      %p117 = scmp.ne.s32.totalorder %s106, %s109
      %p118 = scmp.eq.s32.totalorder %s19, 3
      %p119 = por %p117, %p118
      %p120 = scmp.ne.s32.totalorder %s109, %s110
      %p121 = scmp.eq.s32.totalorder %s19, 0
      %p122 = por %p120, %p121
      %p123 = scmp.ne.s32.totalorder %s109, %s110
      %p124 = scmp.eq.s32.totalorder %s20, 3
      %p125 = por %p123, %p124
      %p127 = scmp.ne.s32.totalorder %s110, %s126
      %p128 = scmp.eq.s32.totalorder %s20, 0
      %p129 = por %p127, %p128
      %p130 = scmp.le.s32.totalorder 1, %s14
      %p131 = scmp.lt.s32.totalorder %s14, 5
      %p132 = pnand %p130, %p131
      %p133 = pneg %p132
      // Predicated region
      $region9: #{tpu_custom_call.1} parent=5 // pred_check
        _
      $region10: #{tpu_custom_call.1} parent=5 // pred_check_branch
        %135 = sbr.rel (%p132) target = $region12
      $region11: #{tpu_custom_call.1} parent=5 // pred_region
        %s136 = ssub.s32 %s14, 1
        // Predicated region
        $region13: #{tpu_custom_call.1} parent=11 // pred_check
          %p137 = pneg %p73
        $region14: #{tpu_custom_call.1} parent=11 // pred_check_branch
          %139 = sbr.rel (%p137) target = $region16
        $region15: #{tpu_custom_call.1} parent=11 // pred_region
          %s141 = ssub.s32 16, 16
          %142 = vsyncadd [#allocation4], %s141
          %s144 = sshll.u32 %s1, 4
          %s145 = int_to_ptr.vmem [resolvable:$true] %s144
          %147 = dma.vmem_to_smem %s145, 16, [#allocation2], [#allocation4]
        $region16: #{tpu_custom_call.1} parent=11 // pred_fallthru
          _
        // Predicated region
        $region17: #{tpu_custom_call.1} parent=11 // pred_check
          %p148 = pneg %p94
        $region18: #{tpu_custom_call.1} parent=11 // pred_check_branch
          %150 = sbr.rel (%p148) target = $region20
        $region19: #{tpu_custom_call.1} parent=11 // pred_region
          %s152 = ssub.s32 16, 16
          %153 = vsyncadd [#allocation6], %s152
          %s155 = sshll.u32 %s2, 4
          %s156 = int_to_ptr.vmem [resolvable:$true] %s155
          %158 = dma.vmem_to_smem %s156, 16, [#allocation5], [#allocation6]
        $region20: #{tpu_custom_call.1} parent=11 // pred_fallthru
          _
      $region12: #{tpu_custom_call.1} parent=5 // pred_fallthru
        _
      %p159 = scmp.lt.s32.totalorder %s14, 4
      // Predicated region
      $region21: #{tpu_custom_call.1} parent=5 // pred_check
        %p160 = pneg %p159
      $region22: #{tpu_custom_call.1} parent=5 // pred_check_branch
        %162 = sbr.rel (%p160) target = $region24
      $region23: #{tpu_custom_call.1} parent=5 // pred_region
        // Predicated region
        $region25: #{tpu_custom_call.1} parent=23 // pred_check
          %p163 = pneg %p46
        $region26: #{tpu_custom_call.1} parent=23 // pred_check_branch
          %165 = sbr.rel (%p163) target = $region28
        $region27: #{tpu_custom_call.1} parent=23 // pred_region
          %p166 = scmp.lt.s32.totalorder %s21, 1
          %s167 = scalar_select %p166, %s21, 1
          %s168 = smul.addr %s167, 12
          %s169 = smul.addr %s168, 8
          %s170 = scalar_lea.vmem %s0, %s169
        $region28: #{tpu_custom_call.1} parent=23 // pred_fallthru
          _
      $region24: #{tpu_custom_call.1} parent=5 // pred_fallthru
        _
      %p171 = scmp.le.s32.totalorder 1, %s14
      %p172 = scmp.lt.s32.totalorder %s14, 5
      %p173 = pnand %p171, %p172
      %p174 = pneg %p173
      // Predicated region
      $region29: #{tpu_custom_call.1} parent=5 // pred_check
        _
      $region30: #{tpu_custom_call.1} parent=5 // pred_check_branch
        %176 = sbr.rel (%p173) target = $region32
      $region31: #{tpu_custom_call.1} parent=5 // pred_region
        %s177 = ssub.s32 %s14, 1
        // Predicated region
        $region33: #{tpu_custom_call.1} parent=31 // pred_check
          %p178 = pneg %p73
        $region34: #{tpu_custom_call.1} parent=31 // pred_check_branch
          %180 = sbr.rel (%p178) target = $region36
        $region35: #{tpu_custom_call.1} parent=31 // pred_region
          %181 = dma.done [#allocation4], 16
        $region36: #{tpu_custom_call.1} parent=31 // pred_fallthru
          _
        // Predicated region
        $region37: #{tpu_custom_call.1} parent=31 // pred_check
          %p182 = pneg %p94
        $region38: #{tpu_custom_call.1} parent=31 // pred_check_branch
          %184 = sbr.rel (%p182) target = $region40
        $region39: #{tpu_custom_call.1} parent=31 // pred_region
          %185 = dma.done [#allocation6], 16
        $region40: #{tpu_custom_call.1} parent=31 // pred_fallthru
          _
        %186 = sfence
        %p187 = scmp.lt.s32.totalorder %s23, 1
        %s188 = scalar_select %p187, %s23, 1
        %s189 = smul.addr %s188, 12
        %s190 = smul.addr %s189, 8
        %s191 = scalar_lea.vmem %s0, %s190
        %p192 = pneg %p52
        %p193 = pneg %p49
        %p194 = pneg %p73
        %p195 = pneg %p70
        %p196 = pneg %p94
        %p197 = pneg %p91
        %p198 = pneg %p122
        %p199 = pneg %p119
        %s200 = sand.u32 %s109, 1
        %s201 = scalar_lea.sflag [#allocation3], %s200
        %s202 = sand.u32 %s109, 1
        %s203 = smul.addr %s202, 8
        %s204 = scalar_lea.vmem [#allocation7], %s203
        %p205 = scmp.lt.s32.totalorder %s23, 1
        %s206 = scalar_select %p205, %s23, 1
        %s207 = smul.addr %s206, 12
        %s208 = smul.addr %s207, 8
        %s209 = scalar_lea.vmem %s0, %s208
        %s210 = smul.u32 %s24, 8
        %s211 = scalar_lea.vmem %s209, %s210
        %v212 = vld [vmem:[%s211] sm:$0xff]
        %s213 = sld [smem:[#allocation2]]
        %v214 = vstv %s213
        %v215 = vmul.f32 %v212, %v214
        %s216 = sld [smem:[#allocation2 + $0x1]]
        %v217 = vstv %s216
        %v218 = vmul.f32 %v212, %v217
        %220 = vrot.lane.b32.xlu0 %v218, 127
        %v221 = vpop.permute.xlu0 %220
        %v223 = vadd.f32 %v215, %v221
        %s224 = sld [smem:[#allocation2 + $0x2]]
        %v225 = vstv %s224
        %v226 = vmul.f32 %v212, %v225
        %228 = vrot.lane.b32.xlu0 %v226, 126
        %v229 = vpop.permute.xlu0 %228
        %v231 = vadd.f32 %v223, %v229
        %s232 = sadd.s32 %s210, 1
        %s233 = scalar_lea.vmem %s209, %s232
        %v234 = vld [vmem:[%s233] sm:$0xff]
        %s235 = sld [smem:[#allocation2 + $0x3]]
        %v236 = vstv %s235
        %v237 = vmul.f32 %v234, %v236
        %v238 = vadd.f32 %v231, %v237
        %s239 = sld [smem:[#allocation2 + $0x4]]
        %v240 = vstv %s239
        %v241 = vmul.f32 %v234, %v240
        %243 = vrot.lane.b32.xlu0 %v241, 127
        %v244 = vpop.permute.xlu0 %243
        %v246 = vadd.f32 %v238, %v244
        %s247 = sld [smem:[#allocation2 + $0x5]]
        %v248 = vstv %s247
        %v249 = vmul.f32 %v234, %v248
        %251 = vrot.lane.b32.xlu0 %v249, 126
        %v252 = vpop.permute.xlu0 %251
        %v254 = vadd.f32 %v246, %v252
        %s255 = sadd.s32 %s210, 2
        %s256 = scalar_lea.vmem %s209, %s255
        %v257 = vld [vmem:[%s256] sm:$0xff]
        %s258 = sld [smem:[#allocation2 + $0x6]]
        %v259 = vstv %s258
        %v260 = vmul.f32 %v257, %v259
        %v261 = vadd.f32 %v254, %v260
        %s262 = sld [smem:[#allocation2 + $0x7]]
        %v263 = vstv %s262
        %v264 = vmul.f32 %v257, %v263
        %266 = vrot.lane.b32.xlu0 %v264, 127
        %v267 = vpop.permute.xlu0 %266
        %v269 = vadd.f32 %v261, %v267
        %s270 = sld [smem:[#allocation2 + $0x8]]
        %v271 = vstv %s270
        %v272 = vmul.f32 %v257, %v271
        %274 = vrot.lane.b32.xlu0 %v272, 126
        %v275 = vpop.permute.xlu0 %274
        %v277 = vadd.f32 %v269, %v275
        %s278 = sadd.s32 %s210, 24
        %s279 = scalar_lea.vmem %s209, %s278
        %v280 = vld [vmem:[%s279] sm:$0xff]
        %s281 = sld [smem:[#allocation2 + $0x9]]
        %v282 = vstv %s281
        %v283 = vmul.f32 %v280, %v282
        %s284 = sld [smem:[#allocation2 + $0xa]]
        %v285 = vstv %s284
        %v286 = vmul.f32 %v280, %v285
        %288 = vrot.lane.b32.xlu0 %v286, 127
        %v289 = vpop.permute.xlu0 %288
        %v291 = vadd.f32 %v283, %v289
        %s292 = sld [smem:[#allocation2 + $0xb]]
        %v293 = vstv %s292
        %v294 = vmul.f32 %v280, %v293
        %296 = vrot.lane.b32.xlu0 %v294, 126
        %v297 = vpop.permute.xlu0 %296
        %v299 = vadd.f32 %v291, %v297
        %s300 = sadd.s32 %s232, 24
        %s301 = scalar_lea.vmem %s209, %s300
        %v302 = vld [vmem:[%s301] sm:$0xff]
        %s303 = sld [smem:[#allocation2 + $0xc]]
        %v304 = vstv %s303
        %v305 = vmul.f32 %v302, %v304
        %v306 = vadd.f32 %v299, %v305
        %s307 = sld [smem:[#allocation2 + $0xd]]
        %v308 = vstv %s307
        %v309 = vmul.f32 %v302, %v308
        %311 = vrot.lane.b32.xlu0 %v309, 127
        %v312 = vpop.permute.xlu0 %311
        %v314 = vadd.f32 %v306, %v312
        %s315 = sld [smem:[#allocation2 + $0xe]]
        %v316 = vstv %s315
        %v317 = vmul.f32 %v302, %v316
        %319 = vrot.lane.b32.xlu0 %v317, 126
        %v320 = vpop.permute.xlu0 %319
        %v322 = vadd.f32 %v314, %v320
        %s323 = sadd.s32 %s255, 24
        %s324 = scalar_lea.vmem %s209, %s323
        %v325 = vld [vmem:[%s324] sm:$0xff]
        %s326 = sld [smem:[#allocation2 + $0xf]]
        %v327 = vstv %s326
        %v328 = vmul.f32 %v325, %v327
        %v329 = vadd.f32 %v322, %v328
        %s330 = sld [smem:[#allocation2 + $0x10]]
        %v331 = vstv %s330
        %v332 = vmul.f32 %v325, %v331
        %334 = vrot.lane.b32.xlu0 %v332, 127
        %v335 = vpop.permute.xlu0 %334
        %v337 = vadd.f32 %v329, %v335
        %s338 = sld [smem:[#allocation2 + $0x11]]
        %v339 = vstv %s338
        %v340 = vmul.f32 %v325, %v339
        %342 = vrot.lane.b32.xlu0 %v340, 126
        %v343 = vpop.permute.xlu0 %342
        %v345 = vadd.f32 %v337, %v343
        %s346 = sadd.s32 %s210, 48
        %s347 = scalar_lea.vmem %s209, %s346
        %v348 = vld [vmem:[%s347] sm:$0xff]
        %s349 = sld [smem:[#allocation2 + $0x12]]
        %v350 = vstv %s349
        %v351 = vmul.f32 %v348, %v350
        %s352 = sld [smem:[#allocation2 + $0x13]]
        %v353 = vstv %s352
        %v354 = vmul.f32 %v348, %v353
        %356 = vrot.lane.b32.xlu0 %v354, 127
        %v357 = vpop.permute.xlu0 %356
        %v359 = vadd.f32 %v351, %v357
        %s360 = sld [smem:[#allocation2 + $0x14]]
        %v361 = vstv %s360
        %v362 = vmul.f32 %v348, %v361
        %364 = vrot.lane.b32.xlu0 %v362, 126
        %v365 = vpop.permute.xlu0 %364
        %v367 = vadd.f32 %v359, %v365
        %s368 = sadd.s32 %s232, 48
        %s369 = scalar_lea.vmem %s209, %s368
        %v370 = vld [vmem:[%s369] sm:$0xff]
        %s371 = sld [smem:[#allocation2 + $0x15]]
        %v372 = vstv %s371
        %v373 = vmul.f32 %v370, %v372
        %v374 = vadd.f32 %v367, %v373
        %s375 = sld [smem:[#allocation2 + $0x16]]
        %v376 = vstv %s375
        %v377 = vmul.f32 %v370, %v376
        %379 = vrot.lane.b32.xlu0 %v377, 127
        %v380 = vpop.permute.xlu0 %379
        %v382 = vadd.f32 %v374, %v380
        %s383 = sld [smem:[#allocation2 + $0x17]]
        %v384 = vstv %s383
        %v385 = vmul.f32 %v370, %v384
        %387 = vrot.lane.b32.xlu0 %v385, 126
        %v388 = vpop.permute.xlu0 %387
        %v390 = vadd.f32 %v382, %v388
        %s391 = sadd.s32 %s255, 48
        %s392 = scalar_lea.vmem %s209, %s391
        %v393 = vld [vmem:[%s392] sm:$0xff]
        %s394 = sld [smem:[#allocation2 + $0x18]]
        %v395 = vstv %s394
        %v396 = vmul.f32 %v393, %v395
        %v397 = vadd.f32 %v390, %v396
        %s398 = sld [smem:[#allocation2 + $0x19]]
        %v399 = vstv %s398
        %v400 = vmul.f32 %v393, %v399
        %402 = vrot.lane.b32.xlu0 %v400, 127
        %v403 = vpop.permute.xlu0 %402
        %v405 = vadd.f32 %v397, %v403
        %s406 = sld [smem:[#allocation2 + $0x1a]]
        %v407 = vstv %s406
        %v408 = vmul.f32 %v393, %v407
        %410 = vrot.lane.b32.xlu0 %v408, 126
        %v411 = vpop.permute.xlu0 %410
        %v413 = vadd.f32 %v405, %v411
        %s414 = sadd.s32 %s210, 72
        %s415 = scalar_lea.vmem %s209, %s414
        %v416 = vld [vmem:[%s415] sm:$0xff]
        %s417 = sld [smem:[#allocation2 + $0x1b]]
        %v418 = vstv %s417
        %v419 = vmul.f32 %v416, %v418
        %s420 = sld [smem:[#allocation2 + $0x1c]]
        %v421 = vstv %s420
        %v422 = vmul.f32 %v416, %v421
        %424 = vrot.lane.b32.xlu0 %v422, 127
        %v425 = vpop.permute.xlu0 %424
        %v427 = vadd.f32 %v419, %v425
        %s428 = sld [smem:[#allocation2 + $0x1d]]
        %v429 = vstv %s428
        %v430 = vmul.f32 %v416, %v429
        %432 = vrot.lane.b32.xlu0 %v430, 126
        %v433 = vpop.permute.xlu0 %432
        %v435 = vadd.f32 %v427, %v433
        %s436 = sadd.s32 %s232, 72
        %s437 = scalar_lea.vmem %s209, %s436
        %v438 = vld [vmem:[%s437] sm:$0xff]
        %s439 = sld [smem:[#allocation2 + $0x1e]]
        %v440 = vstv %s439
        %v441 = vmul.f32 %v438, %v440
        %v442 = vadd.f32 %v435, %v441
        %s443 = sld [smem:[#allocation2 + $0x1f]]
        %v444 = vstv %s443
        %v445 = vmul.f32 %v438, %v444
        %447 = vrot.lane.b32.xlu0 %v445, 127
        %v448 = vpop.permute.xlu0 %447
        %v450 = vadd.f32 %v442, %v448
        %s451 = sld [smem:[#allocation2 + $0x20]]
        %v452 = vstv %s451
        %v453 = vmul.f32 %v438, %v452
        %455 = vrot.lane.b32.xlu0 %v453, 126
        %v456 = vpop.permute.xlu0 %455
        %v458 = vadd.f32 %v450, %v456
        %s459 = sadd.s32 %s255, 72
        %s460 = scalar_lea.vmem %s209, %s459
        %v461 = vld [vmem:[%s460] sm:$0xff]
        %s462 = sld [smem:[#allocation2 + $0x21]]
        %v463 = vstv %s462
        %v464 = vmul.f32 %v461, %v463
        %v465 = vadd.f32 %v458, %v464
        %s466 = sld [smem:[#allocation2 + $0x22]]
        %v467 = vstv %s466
        %v468 = vmul.f32 %v461, %v467
        %470 = vrot.lane.b32.xlu0 %v468, 127
        %v471 = vpop.permute.xlu0 %470
        %v473 = vadd.f32 %v465, %v471
        %s474 = sld [smem:[#allocation2 + $0x23]]
        %v475 = vstv %s474
        %v476 = vmul.f32 %v461, %v475
        %478 = vrot.lane.b32.xlu0 %v476, 126
        %v479 = vpop.permute.xlu0 %478
        %v481 = vadd.f32 %v473, %v479
        %s482 = sld [smem:[#allocation5]]
        %v483 = vstv %s482
        %v484 = vmul.f32 %v277, %v483
        %s485 = sld [smem:[#allocation5 + $0x1]]
        %v486 = vstv %s485
        %v487 = vmul.f32 %v345, %v486
        %v488 = vadd.f32 %v484, %v487
        %s489 = sld [smem:[#allocation5 + $0x2]]
        %v490 = vstv %s489
        %v491 = vmul.f32 %v413, %v490
        %v492 = vadd.f32 %v488, %v491
        %s493 = sld [smem:[#allocation5 + $0x3]]
        %v494 = vstv %s493
        %v495 = vmul.f32 %v481, %v494
        %v496 = vadd.f32 %v492, %v495
        %vm497 = vcmask 130048
        %498 = vst.msk [vmem:[%s204] sm:$0xff] %vm497, %v496
        %s499 = sld [smem:[#allocation5 + $0x4]]
        %v500 = vstv %s499
        %v501 = vmul.f32 %v277, %v500
        %s502 = sld [smem:[#allocation5 + $0x5]]
        %v503 = vstv %s502
        %v504 = vmul.f32 %v345, %v503
        %v505 = vadd.f32 %v501, %v504
        %s506 = sld [smem:[#allocation5 + $0x6]]
        %v507 = vstv %s506
        %v508 = vmul.f32 %v413, %v507
        %v509 = vadd.f32 %v505, %v508
        %s510 = sld [smem:[#allocation5 + $0x7]]
        %v511 = vstv %s510
        %v512 = vmul.f32 %v481, %v511
        %v513 = vadd.f32 %v509, %v512
        %515 = vrot.lane.b32.xlu0 %v513, 16
        %v516 = vpop.permute.xlu0 %515
        %vm518 = vcmask 261248
        %519 = vst.msk [vmem:[%s204] sm:$0xff] %vm518, %v516
        %s520 = sld [smem:[#allocation5 + $0x8]]
        %v521 = vstv %s520
        %v522 = vmul.f32 %v277, %v521
        %s523 = sld [smem:[#allocation5 + $0x9]]
        %v524 = vstv %s523
        %v525 = vmul.f32 %v345, %v524
        %v526 = vadd.f32 %v522, %v525
        %s527 = sld [smem:[#allocation5 + $0xa]]
        %v528 = vstv %s527
        %v529 = vmul.f32 %v413, %v528
        %v530 = vadd.f32 %v526, %v529
        %s531 = sld [smem:[#allocation5 + $0xb]]
        %v532 = vstv %s531
        %v533 = vmul.f32 %v481, %v532
        %v534 = vadd.f32 %v530, %v533
        %536 = vrot.lane.b32.xlu0 %v534, 32
        %v537 = vpop.permute.xlu0 %536
        %vm539 = vcmask 392448
        %540 = vst.msk [vmem:[%s204] sm:$0xff] %vm539, %v537
        %s541 = sld [smem:[#allocation5 + $0xc]]
        %v542 = vstv %s541
        %v543 = vmul.f32 %v277, %v542
        %s544 = sld [smem:[#allocation5 + $0xd]]
        %v545 = vstv %s544
        %v546 = vmul.f32 %v345, %v545
        %v547 = vadd.f32 %v543, %v546
        %s548 = sld [smem:[#allocation5 + $0xe]]
        %v549 = vstv %s548
        %v550 = vmul.f32 %v413, %v549
        %v551 = vadd.f32 %v547, %v550
        %s552 = sld [smem:[#allocation5 + $0xf]]
        %v553 = vstv %s552
        %v554 = vmul.f32 %v481, %v553
        %v555 = vadd.f32 %v551, %v554
        %557 = vrot.lane.b32.xlu0 %v555, 48
        %v558 = vpop.permute.xlu0 %557
        %vm560 = vcmask 523648
        %561 = vst.msk [vmem:[%s204] sm:$0xff] %vm560, %v558
        %s562 = sld [smem:[#allocation5 + $0x10]]
        %v563 = vstv %s562
        %v564 = vmul.f32 %v277, %v563
        %s565 = sld [smem:[#allocation5 + $0x11]]
        %v566 = vstv %s565
        %v567 = vmul.f32 %v345, %v566
        %v568 = vadd.f32 %v564, %v567
        %s569 = sld [smem:[#allocation5 + $0x12]]
        %v570 = vstv %s569
        %v571 = vmul.f32 %v413, %v570
        %v572 = vadd.f32 %v568, %v571
        %s573 = sld [smem:[#allocation5 + $0x13]]
        %v574 = vstv %s573
        %v575 = vmul.f32 %v481, %v574
        %v576 = vadd.f32 %v572, %v575
        %578 = vrot.lane.b32.xlu0 %v576, 64
        %v579 = vpop.permute.xlu0 %578
        %vm581 = vcmask 654848
        %582 = vst.msk [vmem:[%s204] sm:$0xff] %vm581, %v579
        %s583 = sld [smem:[#allocation5 + $0x14]]
        %v584 = vstv %s583
        %v585 = vmul.f32 %v277, %v584
        %s586 = sld [smem:[#allocation5 + $0x15]]
        %v587 = vstv %s586
        %v588 = vmul.f32 %v345, %v587
        %v589 = vadd.f32 %v585, %v588
        %s590 = sld [smem:[#allocation5 + $0x16]]
        %v591 = vstv %s590
        %v592 = vmul.f32 %v413, %v591
        %v593 = vadd.f32 %v589, %v592
        %s594 = sld [smem:[#allocation5 + $0x17]]
        %v595 = vstv %s594
        %v596 = vmul.f32 %v481, %v595
        %v597 = vadd.f32 %v593, %v596
        %599 = vrot.lane.b32.xlu0 %v597, 80
        %v600 = vpop.permute.xlu0 %599
        %vm602 = vcmask 786048
        %603 = vst.msk [vmem:[%s204] sm:$0xff] %vm602, %v600
        %s604 = sld [smem:[#allocation5 + $0x18]]
        %v605 = vstv %s604
        %v606 = vmul.f32 %v277, %v605
        %s607 = sld [smem:[#allocation5 + $0x19]]
        %v608 = vstv %s607
        %v609 = vmul.f32 %v345, %v608
        %v610 = vadd.f32 %v606, %v609
        %s611 = sld [smem:[#allocation5 + $0x1a]]
        %v612 = vstv %s611
        %v613 = vmul.f32 %v413, %v612
        %v614 = vadd.f32 %v610, %v613
        %s615 = sld [smem:[#allocation5 + $0x1b]]
        %v616 = vstv %s615
        %v617 = vmul.f32 %v481, %v616
        %v618 = vadd.f32 %v614, %v617
        %620 = vrot.lane.b32.xlu0 %v618, 96
        %v621 = vpop.permute.xlu0 %620
        %vm623 = vcmask 917248
        %624 = vst.msk [vmem:[%s204] sm:$0xff] %vm623, %v621
        %s625 = sld [smem:[#allocation5 + $0x1c]]
        %v626 = vstv %s625
        %v627 = vmul.f32 %v277, %v626
        %s628 = sld [smem:[#allocation5 + $0x1d]]
        %v629 = vstv %s628
        %v630 = vmul.f32 %v345, %v629
        %v631 = vadd.f32 %v627, %v630
        %s632 = sld [smem:[#allocation5 + $0x1e]]
        %v633 = vstv %s632
        %v634 = vmul.f32 %v413, %v633
        %v635 = vadd.f32 %v631, %v634
        %s636 = sld [smem:[#allocation5 + $0x1f]]
        %v637 = vstv %s636
        %v638 = vmul.f32 %v481, %v637
        %v639 = vadd.f32 %v635, %v638
        %641 = vrot.lane.b32.xlu0 %v639, 112
        %v642 = vpop.permute.xlu0 %641
        %vm644 = vcmask 1048448
        %645 = vst.msk [vmem:[%s204] sm:$0xff] %vm644, %v642
        %s646 = sand.u32 %s109, 1
        %s647 = scalar_lea.sflag [#allocation3], %s646
        %s648 = sand.u32 %s109, 1
        %s649 = smul.addr %s648, 8
        %s650 = scalar_lea.vmem [#allocation7], %s649
        // Predicated region
        $region41: #{tpu_custom_call.1} parent=31 // pred_check
          %p651 = pneg %p119
        $region42: #{tpu_custom_call.1} parent=31 // pred_check_branch
          %653 = sbr.rel (%p651) target = $region44
        $region43: #{tpu_custom_call.1} parent=31 // pred_region
          %s655 = ssub.s32 128, 128
          %656 = vsyncadd %s647, %s655
          %s657 = smul.addr %s23, 2
          %s658 = sadd.s32 %s24, %s657
          %s659 = smul.addr %s658, 128
          %s660 = scalar_lea.hbm %s3, %s659
          %s662 = sshll.u32 %s650, 4
          %s663 = int_to_ptr.vmem [resolvable:$true] %s662
          %665 = dma.vmem_to_hbm [thread:$0]  %s663, 128, %s660, %s647
        $region44: #{tpu_custom_call.1} parent=31 // pred_fallthru
          _
      $region32: #{tpu_custom_call.1} parent=5 // pred_fallthru
        _
      %p666 = scmp.le.s32.totalorder 2, %s14
      // Predicated region
      $region45: #{tpu_custom_call.1} parent=5 // pred_check
        %p667 = pneg %p666
      $region46: #{tpu_custom_call.1} parent=5 // pred_check_branch
        %669 = sbr.rel (%p667) target = $region48
      $region47: #{tpu_custom_call.1} parent=5 // pred_region
        %s670 = ssub.s32 %s14, 2
        // Predicated region
        $region49: #{tpu_custom_call.1} parent=47 // pred_check
          %p671 = pneg %p125
        $region50: #{tpu_custom_call.1} parent=47 // pred_check_branch
          %673 = sbr.rel (%p671) target = $region52
        $region51: #{tpu_custom_call.1} parent=47 // pred_region
          %s674 = sand.u32 %s110, 1
          %s675 = scalar_lea.sflag [#allocation3], %s674
          %s676 = sand.u32 %s110, 1
          %s677 = smul.addr %s676, 8
          %s678 = scalar_lea.vmem [#allocation7], %s677
          %679 = dma.done %s675, 128
        $region52: #{tpu_custom_call.1} parent=47 // pred_fallthru
          _
      $region48: #{tpu_custom_call.1} parent=5 // pred_fallthru
        _
    $region6: #{tpu_custom_call.1} parent=1 // loop_footer
      %s18 = sadd.s32 1, %s14
    $region7: #{tpu_custom_call.1} parent=1 // loop_footer_branch
      %13 = sbr.rel target = $region3
    $region8: #{tpu_custom_call.1} parent=1 // loop_exit
      _
    %680 = vsyncpa [#allocation3], 1
    %s681 = scalar_lea.sflag [#allocation3], 1
    %682 = vsyncpa %s681, 1
    %683 = vsyncpa [#allocation4], 1
    %s684 = scalar_lea.sflag [#allocation4], 1
    %685 = vsyncpa %s684, 1
    %686 = vsyncpa [#allocation6], 1

</llo_original>
